<compile_context>
chip_gen: v5e
topology: v5e:2x2
jax: 0.10.0
libtpu: 0.0.40
codegen_flags: <defaults>
</compile_context>

<pallas_src>
import functools

import numpy as np

import jax
import jax.numpy as jnp
from jax.experimental import pallas as pl
from jax.experimental.pallas import tpu as pltpu


def _embed_kernel(x_ref, w_ref, pb_ref, o_ref):
    # x_ref:  (1, TNP, K)  bf16 patch tile for one batch element (streamed)
    # w_ref:  (K, D)       bf16 flattened conv weight (resident across the grid)
    # pb_ref: (TNP, D)     bf16/f32 position embedding + conv bias for this tile
    # o_ref:  (1, TNP, D)  output tile (lane-dense when D % 128 == 0)
    acc = jnp.dot(x_ref[0], w_ref[...], preferred_element_type=jnp.float32)
    o_ref[0] = (acc + pb_ref[...].astype(jnp.float32)).astype(o_ref.dtype)


@functools.partial(jax.jit,
                   static_argnames=("patch_size", "patch_tile", "out_dtype"))
def siglip_vision_embeddings(pixel_values, conv_w, conv_b, pos_emb,
                             patch_size: int, patch_tile: int = 256,
                             out_dtype=jnp.bfloat16):
    """pixel_values: [B, C, H, W] (NCHW); conv_w: [D, C, P, P]; conv_b: [D];
    pos_emb: [NP, D].  Returns [B, NP, D] in out_dtype (default bf16, matching
    the downstream bf16 Siglip encoder)."""
    B, C, H, W = pixel_values.shape
    D = conv_w.shape[0]
    P = patch_size
    assert H % P == 0 and W % P == 0, "image size must be divisible by patch_size"
    nH, nW = H // P, W // P
    NP = nH * nW
    K = C * P * P
    assert conv_w.shape == (D, C, P, P)
    assert conv_b.shape == (D,)
    # Kernel assumes position_ids == arange(NP) (no interpolated pos-emb).
    assert pos_emb.shape == (NP, D)

    # --- host-side glue (one XLA fusion; permute done in bf16 to halve its HBM cost)
    x = pixel_values.astype(jnp.bfloat16).reshape(B, C, nH, P, nW, P)
    patches = x.transpose(0, 2, 4, 1, 3, 5).reshape(B, NP, K)         # (B, NP, K) bf16
    w_flat = conv_w.reshape(D, K).T.astype(jnp.bfloat16)              # (K, D)     bf16
    # Fold the conv bias into the position embedding; stream it narrow (bf16)
    # whenever the output is narrower than f32.  The in-kernel add is always f32.
    pos_stream_dtype = (jnp.float32 if np.dtype(out_dtype).itemsize >= 4
                        else jnp.bfloat16)
    pos_bias = (pos_emb.astype(jnp.float32)
                + conv_b.astype(jnp.float32)[None, :]).astype(pos_stream_dtype)

    # Fixed patch tile; the ragged last tile (NP % TNP != 0) is masked by Pallas.
    TNP = patch_tile if NP > patch_tile else NP
    num_tiles = pl.cdiv(NP, TNP)
    # Patch-tile axis OUTER, batch INNER: pos_bias block index (t, 0) is constant
    # across the inner loop, so it is not re-DMA'd per batch element.
    grid = (num_tiles, B)

    out = pl.pallas_call(
        _embed_kernel,
        out_shape=jax.ShapeDtypeStruct((B, NP, D), out_dtype),
        grid_spec=pltpu.PrefetchScalarGridSpec(
            num_scalar_prefetch=0,
            grid=grid,
            in_specs=[
                pl.BlockSpec((1, TNP, K), lambda t, b: (b, t, 0)),   # streamed patches
                pl.BlockSpec((K, D), lambda t, b: (0, 0)),           # resident weight
                pl.BlockSpec((TNP, D), lambda t, b: (t, 0)),         # pos + bias tile
            ],
            out_specs=pl.BlockSpec((1, TNP, D), lambda t, b: (b, t, 0)),
        ),
        compiler_params=pltpu.CompilerParams(
            dimension_semantics=("parallel", "parallel")),
    )(patches, w_flat, pos_bias)
    return out


def _reference(pixel_values, conv_w, conv_b, pos_emb, patch_size):
    # Plain-JAX reference mirroring the PyTorch forward (for verification).
    B, C, H, W = pixel_values.shape
    D = conv_w.shape[0]
    P = patch_size
    y = jax.lax.conv_general_dilated(
        pixel_values, conv_w, window_strides=(P, P), padding="VALID",
        dimension_numbers=("NCHW", "OIHW", "NCHW"))              # [B, D, nH, nW]
    y = y + conv_b.reshape(1, D, 1, 1)
    y = y.reshape(B, D, -1).transpose(0, 2, 1)                    # [B, NP, D]
    return y + pos_emb[None]


if __name__ == "__main__":
    # Small SiglipVisionConfig-style shapes.  D is kept a multiple of 128 so the
    # output stores stay lane-dense (as for real Siglip D=768/1152), and NP=36
    # with patch_tile=16 exercises the masked ragged last tile (36 = 2*16 + 4).
    B, C = 2, 3
    H = W = 24
    P = 4
    D = 128
    NP = (H // P) * (W // P)          # 36 patches
    K = C * P * P                     # 48

    key = jax.random.PRNGKey(0)
    k1, k2, k3, k4 = jax.random.split(key, 4)
    pixel_values = jax.random.normal(k1, (B, C, H, W), jnp.float32)
    conv_w = jax.random.normal(k2, (D, C, P, P), jnp.float32) * 0.05
    conv_b = jax.random.normal(k3, (D,), jnp.float32) * 0.05
    pos_emb = jax.random.normal(k4, (NP, D), jnp.float32) * 0.02

    ref = _reference(pixel_values, conv_w, conv_b, pos_emb, P)

    # Default (bf16) output path.
    out_bf16 = siglip_vision_embeddings(pixel_values, conv_w, conv_b, pos_emb,
                                        patch_size=P, patch_tile=16)
    out_bf16 = jax.block_until_ready(out_bf16)
    assert out_bf16.shape == (B, NP, D), out_bf16.shape
    assert out_bf16.dtype == jnp.bfloat16, out_bf16.dtype
    err_bf16 = float(jnp.max(jnp.abs(out_bf16.astype(jnp.float32) - ref)))
    assert jnp.allclose(out_bf16.astype(jnp.float32), ref, atol=3e-2, rtol=3e-2), err_bf16

    # f32 output path (bf16 matmul operands -> loose-ish tolerance vs f32 conv ref).
    out_f32 = siglip_vision_embeddings(pixel_values, conv_w, conv_b, pos_emb,
                                       patch_size=P, patch_tile=16,
                                       out_dtype=jnp.float32)
    out_f32 = jax.block_until_ready(out_f32)
    assert out_f32.shape == (B, NP, D), out_f32.shape
    assert out_f32.dtype == jnp.float32, out_f32.dtype
    err_f32 = float(jnp.max(jnp.abs(out_f32 - ref)))
    assert jnp.allclose(out_f32, ref, atol=2e-2, rtol=2e-2), err_f32

    print("KERNEL_OK")
</pallas_src>

<mosaic_0001>
module attributes {stable_mosaic.version = 11 : i64} {
  func.func @_embed_kernel(%arg0: i32, %arg1: i32, %arg2: memref<1x16x48xbf16, #tpu.memory_space<vmem>>, %arg3: memref<48x128xbf16, #tpu.memory_space<vmem>>, %arg4: memref<16x128xbf16, #tpu.memory_space<vmem>>, %arg5: memref<1x16x128xbf16, #tpu.memory_space<vmem>>) attributes {dimension_semantics = [#tpu.dimension_semantics<parallel>, #tpu.dimension_semantics<parallel>], iteration_bounds = array<i64: 3, 2>, scalar_prefetch = 0 : i64, scratch_operands = 0 : i64, tpu.core_type = #tpu.core_type<tc>, window_params = [{transform_indices = @transform_0, window_bounds = array<i64: 1, 16, 48>}, {pipeline_mode = #tpu.pipeline_mode<synchronous>, transform_indices = @transform_1, window_bounds = array<i64: 48, 128>}, {transform_indices = @transform_2, window_bounds = array<i64: 16, 128>}, {transform_indices = @transform_3, window_bounds = array<i64: 1, 16, 128>}]} {
    %c0 = arith.constant 0 : index
    %c0_0 = arith.constant 0 : index
    %c0_1 = arith.constant 0 : index
    %0 = vector.load %arg2[%c0, %c0_0, %c0_1] : memref<1x16x48xbf16, #tpu.memory_space<vmem>>, vector<1x16x48xbf16>
    %1 = vector.shape_cast %0 : vector<1x16x48xbf16> to vector<16x48xbf16>
    %c0_2 = arith.constant 0 : index
    %c0_3 = arith.constant 0 : index
    %2 = vector.load %arg3[%c0_2, %c0_3] : memref<48x128xbf16, #tpu.memory_space<vmem>>, vector<48x128xbf16>
    %cst = arith.constant dense<0.000000e+00> : vector<16x128xf32>
    %3 = tpu.matmul %1, %2, %cst {dimension_numbers = #tpu.dot_dimension_numbers<[1], [0], [0], [1], [0, 0, 1, 1], [], []>} : vector<16x48xbf16>, vector<48x128xbf16>, vector<16x128xf32> -> vector<16x128xf32>
    %c0_4 = arith.constant 0 : index
    %c0_5 = arith.constant 0 : index
    %4 = vector.load %arg4[%c0_4, %c0_5] : memref<16x128xbf16, #tpu.memory_space<vmem>>, vector<16x128xbf16>
    %5 = arith.extf %4 : vector<16x128xbf16> to vector<16x128xf32>
    %6 = arith.addf %3, %5 : vector<16x128xf32>
    %7 = arith.truncf %6 : vector<16x128xf32> to vector<16x128xbf16>
    %c0_6 = arith.constant 0 : index
    %c0_7 = arith.constant 0 : index
    %c0_8 = arith.constant 0 : index
    %8 = vector.load %arg5[%c0_6, %c0_7, %c0_8] : memref<1x16x128xbf16, #tpu.memory_space<vmem>>, vector<1x16x128xbf16>
    %9 = vector.shape_cast %8 : vector<1x16x128xbf16> to vector<16x128xbf16>
    %10 = vector.shape_cast %7 : vector<16x128xbf16> to vector<1x16x128xbf16>
    tpu.vector_store %arg5[%c0_6, %c0_7, %c0_8], %10 {strides = array<i32>} : memref<1x16x128xbf16, #tpu.memory_space<vmem>>, vector<1x16x128xbf16>,
    return
  }
  func.func @transform_0(%arg0: i32, %arg1: i32) -> (i32, i32, i32) {
    %c0_i32 = arith.constant 0 : i32
    %c0_i32_0 = arith.constant 0 : i32
    return %arg1, %arg0, %c0_i32 : i32, i32, i32
  }
  func.func @transform_1(%arg0: i32, %arg1: i32) -> (i32, i32) {
    %c0_i32 = arith.constant 0 : i32
    %c0_i32_0 = arith.constant 0 : i32
    %c0_i32_1 = arith.constant 0 : i32
    return %c0_i32, %c0_i32_0 : i32, i32
  }
  func.func @transform_2(%arg0: i32, %arg1: i32) -> (i32, i32) {
    %c0_i32 = arith.constant 0 : i32
    %c0_i32_0 = arith.constant 0 : i32
    return %arg0, %c0_i32 : i32, i32
  }
  func.func @transform_3(%arg0: i32, %arg1: i32) -> (i32, i32, i32) {
    %c0_i32 = arith.constant 0 : i32
    %c0_i32_0 = arith.constant 0 : i32
    return %arg1, %arg0, %c0_i32 : i32, i32, i32
  }
}

</mosaic_0001>

<llo_original>
// kernel: siglip_vision_embeddings.1
$region0: #{siglip_vision_embeddings.1}
  #allocation0 [shape = 'u32[]', space=smem, size = 0x4, offset = 0x4, fixed_abs, tag = 'smem constant byte address 0x4 - core index']
  #allocation1 [shape = 'u32[72,128]{1,0:T(1,128)}', space=vmem, size = 0x9000, scoped, tag = 'internal scratch']
  %s0 = inlined_call_operand.vmem [shape: bf16[2,36,48], index: 0, kind: input, shape index: {}]
  %s1 = inlined_call_operand.vmem [shape: bf16[48,128], index: 1, kind: input, shape index: {}]
  %s2 = inlined_call_operand.vmem [shape: bf16[36,128], index: 2, kind: input, shape index: {}]
  %s3 = inlined_call_operand.vmem [shape: bf16[2,36,128], index: 3, kind: output, shape index: {}]
  %s4 = sld [smem:[#allocation0]]
  $region89: #{siglip_vision_embeddings.1} parent=0
    _
  %s6 = ssub.s32 1, %s4
  %s7 = scalar_select 0, %s6, %s4
  $region1: #{siglip_vision_embeddings.1} parent=0
    #allocation2 [shape = 'u8[8192]{0}', space=vmem, size = 0x2000, scoped, tag = 'output window, operand 0']
    loop: start=0, step=1, limit=8
    $region2: #{siglip_vision_embeddings.1} parent=1 // loop_pre_header
      _
    $region3: #{siglip_vision_embeddings.1} parent=1 // loop_header
      %s9 = sphi 0, %s13
      %p10 = scmp.ge.s32.totalorder %s9, 8
      %s16 = sphi 0, %s28
      %s17 = sphi 0, %s24
      %s18 = sphi 0, %s16
      %s19 = sphi 0, %s17
      %s20 = sphi 0, %s18
      %s21 = sphi 0, %s19
      %s33 = sphi 0, %s35
      %s36 = sphi 0, %s33
      %s37 = sphi 0, %s36
      %s53 = sphi 0, %s37
      %s57 = sphi 0, %s57
      %s59 = sphi 0, %s57
      %s60 = sphi 0, %s59
      %s74 = sphi 0, %s60
      %s80 = sphi 0, %s82
      %s83 = sphi 0, %s80
      %s84 = sphi 0, %s83
      %s100 = sphi 0, %s84
      %s108 = sphi 0, %s110
      %s111 = sphi 0, %s108
      %s112 = sphi 0, %s111
      %s128 = sphi 0, %s112
    $region4: #{siglip_vision_embeddings.1} parent=1 // loop_header_branch
      %12 = sbr.rel (%p10) target = $region8
    $region5: #{siglip_vision_embeddings.1} parent=1 // loop_body
      %s14 = ssub.s32 %s9, 1
      %s15 = ssub.s32 %s9, 2
      %s22 = sadd.s32 1, %s17
      %p23 = scmp.ge.s32.totalorder %s22, 2
      %s24 = scalar_select %p23, 0, %s22
      %s25 = sadd.s32 1, %s16
      %s26 = scalar_select %p23, %s25, %s16
      %p27 = scmp.ge.s32.totalorder %s26, 3
      %s28 = scalar_select %p27, 0, %s26
      %s29 = ssub.s32 %s17, %s24
      %s30 = ssub.s32 %s16, %s28
      %s31 = sor.u32 %s29, %s30
      %p32 = scmp.eq.s32.totalorder %s31, 0
      %s34 = sadd.s32 %s33, 1
      %s35 = scalar_select %p32, %s33, %s34
      %p38 = pneg %p32
      %p39 = scmp.eq.s32.totalorder %s9, 5
      %p40 = por %p38, %p39
      %p41 = scmp.ne.s32.totalorder %s33, %s36
      %p42 = scmp.eq.s32.totalorder %s9, 0
      %p43 = por %p41, %p42
      %p44 = scmp.ne.s32.totalorder %s33, %s36
      %p45 = scmp.eq.s32.totalorder %s14, 5
      %p46 = por %p44, %p45
      %p47 = scmp.ne.s32.totalorder %s36, %s37
      %p48 = scmp.eq.s32.totalorder %s14, 0
      %p49 = por %p47, %p48
      %p50 = scmp.ne.s32.totalorder %s36, %s37
      %p51 = scmp.eq.s32.totalorder %s15, 5
      %p52 = por %p50, %p51
      %p54 = scmp.ne.s32.totalorder %s37, %s53
      %p55 = scmp.eq.s32.totalorder %s15, 0
      %p56 = por %p54, %p55
      %s58 = sadd.s32 %s57, 1
      %p61 = scmp.eq.s32.totalorder %s9, 5
      %p62 = scmp.ne.s32.totalorder %s57, %s59
      %p63 = scmp.eq.s32.totalorder %s9, 0
      %p64 = por %p62, %p63
      %p65 = scmp.ne.s32.totalorder %s57, %s59
      %p66 = scmp.eq.s32.totalorder %s14, 5
      %p67 = por %p65, %p66
      %p68 = scmp.ne.s32.totalorder %s59, %s60
      %p69 = scmp.eq.s32.totalorder %s14, 0
      %p70 = por %p68, %p69
      %p71 = scmp.ne.s32.totalorder %s59, %s60
      %p72 = scmp.eq.s32.totalorder %s15, 5
      %p73 = por %p71, %p72
      %p75 = scmp.ne.s32.totalorder %s60, %s74
      %p76 = scmp.eq.s32.totalorder %s15, 0
      %p77 = por %p75, %p76
      %s78 = ssub.s32 %s16, %s28
      %p79 = scmp.eq.s32.totalorder %s78, 0
      %s81 = sadd.s32 %s80, 1
      %s82 = scalar_select %p79, %s80, %s81
      %p85 = pneg %p79
      %p86 = scmp.eq.s32.totalorder %s9, 5
      %p87 = por %p85, %p86
      %p88 = scmp.ne.s32.totalorder %s80, %s83
      %p89 = scmp.eq.s32.totalorder %s9, 0
      %p90 = por %p88, %p89
      %p91 = scmp.ne.s32.totalorder %s80, %s83
      %p92 = scmp.eq.s32.totalorder %s14, 5
      %p93 = por %p91, %p92
      %p94 = scmp.ne.s32.totalorder %s83, %s84
      %p95 = scmp.eq.s32.totalorder %s14, 0
      %p96 = por %p94, %p95
      %p97 = scmp.ne.s32.totalorder %s83, %s84
      %p98 = scmp.eq.s32.totalorder %s15, 5
      %p99 = por %p97, %p98
      %p101 = scmp.ne.s32.totalorder %s84, %s100
      %p102 = scmp.eq.s32.totalorder %s15, 0
      %p103 = por %p101, %p102
      %s104 = ssub.s32 %s17, %s24
      %s105 = ssub.s32 %s16, %s28
      %s106 = sor.u32 %s104, %s105
      %p107 = scmp.eq.s32.totalorder %s106, 0
      %s109 = sadd.s32 %s108, 1
      %s110 = scalar_select %p107, %s108, %s109
      %p113 = pneg %p107
      %p114 = scmp.eq.s32.totalorder %s9, 5
      %p115 = por %p113, %p114
      %p116 = scmp.ne.s32.totalorder %s108, %s111
      %p117 = scmp.eq.s32.totalorder %s9, 0
      %p118 = por %p116, %p117
      %p119 = scmp.ne.s32.totalorder %s108, %s111
      %p120 = scmp.eq.s32.totalorder %s14, 5
      %p121 = por %p119, %p120
      %p122 = scmp.ne.s32.totalorder %s111, %s112
      %p123 = scmp.eq.s32.totalorder %s14, 0
      %p124 = por %p122, %p123
      %p125 = scmp.ne.s32.totalorder %s111, %s112
      %p126 = scmp.eq.s32.totalorder %s15, 5
      %p127 = por %p125, %p126
      %p129 = scmp.ne.s32.totalorder %s112, %s128
      %p130 = scmp.eq.s32.totalorder %s15, 0
      %p131 = por %p129, %p130
      %p132 = scmp.le.s32.totalorder 1, %s9
      %p133 = scmp.lt.s32.totalorder %s9, 7
      %p134 = pnand %p132, %p133
      %p135 = pneg %p134
      // Predicated region
      $region9: #{siglip_vision_embeddings.1} parent=5 // pred_check
        _
      $region10: #{siglip_vision_embeddings.1} parent=5 // pred_check_branch
        %137 = sbr.rel (%p134) target = $region12
      $region11: #{siglip_vision_embeddings.1} parent=5 // pred_region
        %s138 = ssub.s32 %s9, 1
        // Predicated region
        $region13: #{siglip_vision_embeddings.1} parent=11 // pred_check
          %p139 = pneg %p70
        $region14: #{siglip_vision_embeddings.1} parent=11 // pred_check_branch
          %141 = sbr.rel (%p139) target = $region16
        $region15: #{siglip_vision_embeddings.1} parent=11 // pred_region
          _
        $region16: #{siglip_vision_embeddings.1} parent=11 // pred_fallthru
          _
      $region12: #{siglip_vision_embeddings.1} parent=5 // pred_fallthru
        _
      %p142 = scmp.lt.s32.totalorder %s9, 6
      // Predicated region
      $region17: #{siglip_vision_embeddings.1} parent=5 // pred_check
        %p143 = pneg %p142
      $region18: #{siglip_vision_embeddings.1} parent=5 // pred_check_branch
        %145 = sbr.rel (%p143) target = $region20
      $region19: #{siglip_vision_embeddings.1} parent=5 // pred_region
        // Predicated region
        $region21: #{siglip_vision_embeddings.1} parent=19 // pred_check
          %p146 = pneg %p43
        $region22: #{siglip_vision_embeddings.1} parent=19 // pred_check_branch
          %148 = sbr.rel (%p146) target = $region24
        $region23: #{siglip_vision_embeddings.1} parent=19 // pred_region
          %s149 = smul.u32 2, %s16
          %s150 = ssub.s32 5, %s149
          %p151 = scmp.lt.s32.totalorder %s150, 2
          %s152 = scalar_select %p151, %s150, 2
          %s153 = smul.u32 4, %s152
          %p154 = scmp.lt.s32.totalorder %s17, 1
          %s155 = scalar_select %p154, %s17, 1
          %p156 = scmp.lt.s32.totalorder %s149, 4
          %s157 = scalar_select %p156, %s149, 4
          %s158 = smul.addr %s155, 5
          %s159 = sadd.s32 %s157, %s158
          %s160 = smul.addr %s159, 4
          %s161 = scalar_lea.vmem %s0, %s160
          %s162 = smul.u32 2, %s16
          %s163 = ssub.s32 5, %s162
          %p164 = scmp.lt.s32.totalorder %s163, 2
          %s165 = scalar_select %p164, %s163, 2
          %s166 = smul.u32 4, %s165
        $region24: #{siglip_vision_embeddings.1} parent=19 // pred_fallthru
          _
        // Predicated region
        $region25: #{siglip_vision_embeddings.1} parent=19 // pred_check
          %p167 = pneg %p90
        $region26: #{siglip_vision_embeddings.1} parent=19 // pred_check_branch
          %169 = sbr.rel (%p167) target = $region28
        $region27: #{siglip_vision_embeddings.1} parent=19 // pred_region
          %s170 = smul.u32 2, %s16
          %s171 = ssub.s32 5, %s170
          %p172 = scmp.lt.s32.totalorder %s171, 2
          %s173 = scalar_select %p172, %s171, 2
          %s174 = smul.u32 4, %s173
          %p175 = scmp.lt.s32.totalorder %s170, 4
          %s176 = scalar_select %p175, %s170, 4
          %s177 = smul.addr %s176, 4
          %s178 = scalar_lea.vmem %s2, %s177
          %s179 = smul.u32 2, %s16
          %s180 = ssub.s32 5, %s179
          %p181 = scmp.lt.s32.totalorder %s180, 2
          %s182 = scalar_select %p181, %s180, 2
          %s183 = smul.u32 4, %s182
        $region28: #{siglip_vision_embeddings.1} parent=19 // pred_fallthru
          _
      $region20: #{siglip_vision_embeddings.1} parent=5 // pred_fallthru
        _
      %p184 = scmp.le.s32.totalorder 1, %s9
      %p185 = scmp.lt.s32.totalorder %s9, 7
      %p186 = pnand %p184, %p185
      %p187 = pneg %p186
      // Predicated region
      $region29: #{siglip_vision_embeddings.1} parent=5 // pred_check
        _
      $region30: #{siglip_vision_embeddings.1} parent=5 // pred_check_branch
        %189 = sbr.rel (%p186) target = $region32
      $region31: #{siglip_vision_embeddings.1} parent=5 // pred_region
        %s190 = ssub.s32 %s9, 1
        %s191 = smul.u32 2, %s18
        %s192 = ssub.s32 5, %s191
        %p193 = scmp.lt.s32.totalorder %s192, 2
        %s194 = scalar_select %p193, %s192, 2
        %s195 = smul.u32 4, %s194
        %p196 = scmp.lt.s32.totalorder %s19, 1
        %s197 = scalar_select %p196, %s19, 1
        %p198 = scmp.lt.s32.totalorder %s191, 4
        %s199 = scalar_select %p198, %s191, 4
        %s200 = smul.addr %s197, 5
        %s201 = sadd.s32 %s199, %s200
        %s202 = smul.addr %s201, 4
        %s203 = scalar_lea.vmem %s0, %s202
        %p204 = pneg %p49
        %p205 = pneg %p46
        %p206 = pneg %p70
        %p207 = pneg %p67
        %s208 = smul.u32 2, %s18
        %s209 = ssub.s32 5, %s208
        %p210 = scmp.lt.s32.totalorder %s209, 2
        %s211 = scalar_select %p210, %s209, 2
        %s212 = smul.u32 4, %s211
        %p213 = scmp.lt.s32.totalorder %s208, 4
        %s214 = scalar_select %p213, %s208, 4
        %s215 = smul.addr %s214, 4
        %s216 = scalar_lea.vmem %s2, %s215
        %p217 = pneg %p96
        %p218 = pneg %p93
        %p219 = pneg %p124
        %p220 = pneg %p121
        %s221 = sand.u32 %s111, 1
        %s222 = sand.u32 %s111, 1
        %s223 = smul.addr %s222, 8
        %s224 = scalar_lea.vmem [#allocation2], %s223
        %s225 = smul.u32 2, %s18
        %s226 = ssub.s32 5, %s225
        %p227 = scmp.lt.s32.totalorder %s226, 2
        %s228 = scalar_select %p227, %s226, 2
        %s229 = smul.u32 4, %s228
        %p230 = scmp.lt.s32.totalorder %s19, 1
        %s231 = scalar_select %p230, %s19, 1
        %p232 = scmp.lt.s32.totalorder %s225, 4
        %s233 = scalar_select %p232, %s225, 4
        %s234 = smul.addr %s231, 5
        %s235 = sadd.s32 %s233, %s234
        %s236 = smul.addr %s235, 4
        %s237 = scalar_lea.vmem %s0, %s236
        %s238 = smul.u32 2, %s18
        %s239 = ssub.s32 5, %s238
        %p240 = scmp.lt.s32.totalorder %s239, 2
        %s241 = scalar_select %p240, %s239, 2
        %s242 = smul.u32 4, %s241
        %s243 = smul.u32 2, %s18
        %s244 = ssub.s32 5, %s243
        %p245 = scmp.lt.s32.totalorder %s244, 2
        %s246 = scalar_select %p245, %s244, 2
        %s247 = smul.u32 4, %s246
        %p248 = scmp.lt.s32.totalorder %s243, 4
        %s249 = scalar_select %p248, %s243, 4
        %s250 = smul.addr %s249, 4
        %s251 = scalar_lea.vmem %s2, %s250
        %s252 = smul.u32 2, %s18
        %s253 = ssub.s32 5, %s252
        %p254 = scmp.lt.s32.totalorder %s253, 2
        %s255 = scalar_select %p254, %s253, 2
        %s256 = smul.u32 4, %s255
        %s257 = smul.u32 2, %s18
        %s258 = ssub.s32 5, %s257
        %p259 = scmp.lt.s32.totalorder %s258, 2
        %s260 = scalar_select %p259, %s258, 2
        %s261 = smul.u32 4, %s260
        %v263 = vld [vmem:[%s237] sm:$0xf]
        %v264 = vld [vmem:[%s237 + $0x4] sm:$0xf]
        %v265 = vld [vmem:[%s1] sm:$0xf]
        %v266 = vld [vmem:[%s1 + $0x4] sm:$0xf]
        %v267 = vld [vmem:[%s1 + $0x8] sm:$0xf]
        %v268 = vld [vmem:[%s1 + $0xc] sm:$0xf]
        %v269 = vld [vmem:[%s1 + $0x10] sm:$0xf]
        %v270 = vld [vmem:[%s1 + $0x14] sm:$0xf]
        %v271 = vld [vmem:[%s251] sm:$0xf]
        %v272 = vld [vmem:[%s251 + $0x4] sm:$0xf]
        %v273 = vunpack.c.l.bf16 %v271
        %v274 = vunpack.c.l.bf16 %v272
        %v277 = vunpack.c.l.b16 %v263
        %v278 = vunpack.c.l.b16 %v264
        %v279 = vpack.c.b16 %v278, %v277
        %v286 = vunpack.c.l.b16 %v265
        %v287 = vunpack.c.l.b16 %v266
        %v288 = vunpack.c.l.b16 %v267
        %v289 = vunpack.c.l.b16 %v268
        %v290 = vunpack.c.l.b16 %v269
        %v291 = vunpack.c.l.b16 %v270
        %v292 = vpack.c.b16 %v287, %v286
        %v293 = vpack.c.b16 %v289, %v288
        %v294 = vpack.c.b16 %v291, %v290
        %vm298 = vcmask 392192
        %v300 = vsel %vm298, %v279, 0
        %302 = vmatpush.bf16.msra.mxu0 0
        %303 = vmatpush.bf16.msra.mxu0 0
        %304 = vmatpush.bf16.msra.mxu0 0
        %305 = vmatpush.bf16.msra.mxu0 0
        %306 = vmatpush.bf16.msra.mxu0 0
        %307 = vmatpush.bf16.msra.mxu0 %v294
        %308 = vmatpush.bf16.msra.mxu0 %v293
        %309 = vmatpush.bf16.msra.mxu0 %v292
        %310 = vmatmul.bf16.gmra.mxu0 %v300
        %v311 = vpop.f32.mrf.mxu0
        %v312 = vadd.f32 %v273, %v311
        %v313 = vpop.f32.mrf.mxu0
        %v314 = vadd.f32 %v274, %v313
        %315 = vdwg.mxu0
        %v316 = vpack.c.bf16 %v312, %v312
        %v317 = vpack.c.bf16 %v314, %v314
        %318 = vst [vmem:[%s224] sm:$0xf] %v316
        %319 = vst [vmem:[%s224 + $0x4] sm:$0xf] %v317
        %s320 = sand.u32 %s111, 1
        %s321 = sand.u32 %s111, 1
        %s322 = smul.addr %s321, 8
        %s323 = scalar_lea.vmem [#allocation2], %s322
        // Predicated region
        $region33: #{siglip_vision_embeddings.1} parent=31 // pred_check
          %p324 = pneg %p121
        $region34: #{siglip_vision_embeddings.1} parent=31 // pred_check_branch
          %326 = sbr.rel (%p324) target = $region36
        $region35: #{siglip_vision_embeddings.1} parent=31 // pred_region
          %s327 = smul.u32 2, %s18
          %s328 = ssub.s32 5, %s327
          %p329 = scmp.lt.s32.totalorder %s328, 2
          %s330 = scalar_select %p329, %s328, 2
          %s331 = smul.u32 4, %s330
          %p332 = scmp.ne.s32.totalorder 0, %s331
          %s333 = smul.addr %s19, 5
          %s334 = sadd.s32 %s327, %s333
          %s335 = smul.addr %s334, 4
          %s336 = scalar_lea.vmem %s3, %s335
          // Predicated region
          $region37: #{siglip_vision_embeddings.1} parent=35 // pred_check
            %p337 = pneg %p332
          $region38: #{siglip_vision_embeddings.1} parent=35 // pred_check_branch
            %339 = sbr.rel (%p337) target = $region40
          $region39: #{siglip_vision_embeddings.1} parent=35 // pred_region
            // Predicated region
            $region41: #{siglip_vision_embeddings.1} parent=39 // pred_check
              _
            $region42: #{siglip_vision_embeddings.1} parent=39 // pred_check_branch
              %341 = sbr.rel target = $region44
            $region43: #{siglip_vision_embeddings.1} parent=39 // pred_region
              // Predicated region
              $region63: #{siglip_vision_embeddings.1} parent=43 // pred_check
                _
              $region64: #{siglip_vision_embeddings.1} parent=43 // pred_check_branch
                %393 = sbr.rel (0) target = $region66
              $region65: #{siglip_vision_embeddings.1} parent=43 // pred_region
                %s395 = ssub.s32 16, 1
                %s396 = sshrl.u32 %s330, 1
                // While loop
                $region67: #{siglip_vision_embeddings.1} parent=65 // loop_pre_header
                  _
                $region68: #{siglip_vision_embeddings.1} parent=65 // loop_header
                  %s398 = sphi 0, %s400
                  %p399 = scmp.ge.s32.totalorder %s398, %s396
                  %s403 = sphi 0, %s412
                  %s404 = sphi %s323, %s415
                  %s405 = sphi %s336, %s416
                $region69: #{siglip_vision_embeddings.1} parent=65 // loop_header_branch
                  %402 = sbr.rel (%p399) target = $region73
                $region70: #{siglip_vision_embeddings.1} parent=65 // loop_body
                  %v406 = vld [vmem:[%s404] sm:%s395]
                  %407 = vst [vmem:[%s405] sm:%s395] %v406
                  %v408 = vld [vmem:[%s404 + $0x4] sm:%s395]
                  %409 = vst [vmem:[%s405 + $0x4] sm:%s395] %v408
                  %s410 = sadd.s32 1, %s403
                  %p411 = scmp.ge.s32.totalorder %s410, %s396
                  %s412 = scalar_select %p411, 0, %s410
                  %s413 = smul.u32 %s412, 8
                  %s414 = smul.u32 %s412, 8
                  %s415 = scalar_lea.vmem %s323, %s413 [#allocation2]
                  %s416 = scalar_lea.vmem %s336, %s414
                $region71: #{siglip_vision_embeddings.1} parent=65 // loop_footer
                  %s400 = sadd.s32 %s398, 1
                $region72: #{siglip_vision_embeddings.1} parent=65 // loop_footer_branch
                  %397 = sbr.rel target = $region68
                $region73: #{siglip_vision_embeddings.1} parent=65 // loop_exit
                  _
                %s417 = sshrl.u32 %s330, 1
                %s418 = sand.u32 %s330, 1
                %s419 = smul.u32 %s417, 2
                %s420 = smul.u32 4, %s419
                %s421 = scalar_lea.vmem %s323, %s420 [#allocation2]
                %s422 = smul.u32 4, %s419
                %s423 = scalar_lea.vmem %s336, %s422
                // While loop
                $region74: #{siglip_vision_embeddings.1} parent=65 // loop_pre_header
                  _
                $region75: #{siglip_vision_embeddings.1} parent=65 // loop_header
                  %s425 = sphi 0, %s427
                  %p426 = scmp.ge.s32.totalorder %s425, %s418
                  %s430 = sphi 0, %s437
                  %s431 = sphi %s421, %s440
                  %s432 = sphi %s423, %s441
                $region76: #{siglip_vision_embeddings.1} parent=65 // loop_header_branch
                  %429 = sbr.rel (%p426) target = $region80
                $region77: #{siglip_vision_embeddings.1} parent=65 // loop_body
                  %v433 = vld [vmem:[%s431] sm:%s395]
                  %434 = vst [vmem:[%s432] sm:%s395] %v433
                  %s435 = sadd.s32 1, %s430
                  %p436 = scmp.ge.s32.totalorder %s435, %s418
                  %s437 = scalar_select %p436, 0, %s435
                  %s438 = smul.u32 %s437, 4
                  %s439 = smul.u32 %s437, 4
                  %s440 = scalar_lea.vmem %s421, %s438 [#allocation2]
                  %s441 = scalar_lea.vmem %s423, %s439
                $region78: #{siglip_vision_embeddings.1} parent=65 // loop_footer
                  %s427 = sadd.s32 %s425, 1
                $region79: #{siglip_vision_embeddings.1} parent=65 // loop_footer_branch
                  %424 = sbr.rel target = $region75
                $region80: #{siglip_vision_embeddings.1} parent=65 // loop_exit
                  _
              $region66: #{siglip_vision_embeddings.1} parent=43 // pred_fallthru
                _
            $region44: #{siglip_vision_embeddings.1} parent=39 // pred_fallthru
              _
            // Predicated region
            $region45: #{siglip_vision_embeddings.1} parent=39 // pred_check
              _
            $region46: #{siglip_vision_embeddings.1} parent=39 // pred_check_branch
              %343 = sbr.rel (0) target = $region48
            $region47: #{siglip_vision_embeddings.1} parent=39 // pred_region
              %s345 = ssub.s32 16, 1
              %s346 = sshrl.u32 %s330, 1
              // While loop
              $region49: #{siglip_vision_embeddings.1} parent=47 // loop_pre_header
                _
              $region50: #{siglip_vision_embeddings.1} parent=47 // loop_header
                %s348 = sphi 0, %s350
                %p349 = scmp.ge.s32.totalorder %s348, %s346
                %s353 = sphi 0, %s362
                %s354 = sphi %s323, %s365
                %s355 = sphi %s336, %s366
              $region51: #{siglip_vision_embeddings.1} parent=47 // loop_header_branch
                %352 = sbr.rel (%p349) target = $region55
              $region52: #{siglip_vision_embeddings.1} parent=47 // loop_body
                %v356 = vld [vmem:[%s354] sm:%s345]
                %357 = vst [vmem:[%s355] sm:%s345] %v356
                %v358 = vld [vmem:[%s354 + $0x4] sm:%s345]
                %359 = vst [vmem:[%s355 + $0x4] sm:%s345] %v358
                %s360 = sadd.s32 1, %s353
                %p361 = scmp.ge.s32.totalorder %s360, %s346
                %s362 = scalar_select %p361, 0, %s360
                %s363 = smul.u32 %s362, 8
                %s364 = smul.u32 %s362, 8
                %s365 = scalar_lea.vmem %s323, %s363 [#allocation2]
                %s366 = scalar_lea.vmem %s336, %s364
              $region53: #{siglip_vision_embeddings.1} parent=47 // loop_footer
                %s350 = sadd.s32 %s348, 1
              $region54: #{siglip_vision_embeddings.1} parent=47 // loop_footer_branch
                %347 = sbr.rel target = $region50
              $region55: #{siglip_vision_embeddings.1} parent=47 // loop_exit
                _
              %s367 = sshrl.u32 %s330, 1
              %s368 = sand.u32 %s330, 1
              %s369 = smul.u32 %s367, 2
              %s370 = smul.u32 4, %s369
              %s371 = scalar_lea.vmem %s323, %s370 [#allocation2]
              %s372 = smul.u32 4, %s369
              %s373 = scalar_lea.vmem %s336, %s372
              // While loop
              $region56: #{siglip_vision_embeddings.1} parent=47 // loop_pre_header
                _
              $region57: #{siglip_vision_embeddings.1} parent=47 // loop_header
                %s375 = sphi 0, %s377
                %p376 = scmp.ge.s32.totalorder %s375, %s368
                %s380 = sphi 0, %s387
                %s381 = sphi %s371, %s390
                %s382 = sphi %s373, %s391
              $region58: #{siglip_vision_embeddings.1} parent=47 // loop_header_branch
                %379 = sbr.rel (%p376) target = $region62
              $region59: #{siglip_vision_embeddings.1} parent=47 // loop_body
                %v383 = vld [vmem:[%s381] sm:%s345]
                %384 = vst [vmem:[%s382] sm:%s345] %v383
                %s385 = sadd.s32 1, %s380
                %p386 = scmp.ge.s32.totalorder %s385, %s368
                %s387 = scalar_select %p386, 0, %s385
                %s388 = smul.u32 %s387, 4
                %s389 = smul.u32 %s387, 4
                %s390 = scalar_lea.vmem %s371, %s388 [#allocation2]
                %s391 = scalar_lea.vmem %s373, %s389
              $region60: #{siglip_vision_embeddings.1} parent=47 // loop_footer
                %s377 = sadd.s32 %s375, 1
              $region61: #{siglip_vision_embeddings.1} parent=47 // loop_footer_branch
                %374 = sbr.rel target = $region57
              $region62: #{siglip_vision_embeddings.1} parent=47 // loop_exit
                _
            $region48: #{siglip_vision_embeddings.1} parent=39 // pred_fallthru
              _
          $region40: #{siglip_vision_embeddings.1} parent=35 // pred_fallthru
            _
          %442 = vnop
        $region36: #{siglip_vision_embeddings.1} parent=31 // pred_fallthru
          _
      $region32: #{siglip_vision_embeddings.1} parent=5 // pred_fallthru
        _
      %p443 = scmp.le.s32.totalorder 2, %s9
      // Predicated region
      $region81: #{siglip_vision_embeddings.1} parent=5 // pred_check
        %p444 = pneg %p443
      $region82: #{siglip_vision_embeddings.1} parent=5 // pred_check_branch
        %446 = sbr.rel (%p444) target = $region84
      $region83: #{siglip_vision_embeddings.1} parent=5 // pred_region
        %s447 = ssub.s32 %s9, 2
        // Predicated region
        $region85: #{siglip_vision_embeddings.1} parent=83 // pred_check
          %p448 = pneg %p127
        $region86: #{siglip_vision_embeddings.1} parent=83 // pred_check_branch
          %450 = sbr.rel (%p448) target = $region88
        $region87: #{siglip_vision_embeddings.1} parent=83 // pred_region
          %s451 = sand.u32 %s112, 1
          %s452 = sand.u32 %s112, 1
          %s453 = smul.addr %s452, 8
          %s454 = scalar_lea.vmem [#allocation2], %s453
        $region88: #{siglip_vision_embeddings.1} parent=83 // pred_fallthru
          _
      $region84: #{siglip_vision_embeddings.1} parent=5 // pred_fallthru
        _
    $region6: #{siglip_vision_embeddings.1} parent=1 // loop_footer
      %s13 = sadd.s32 1, %s9
    $region7: #{siglip_vision_embeddings.1} parent=1 // loop_footer_branch
      %8 = sbr.rel target = $region3
    $region8: #{siglip_vision_embeddings.1} parent=1 // loop_exit
      _

</llo_original>
